<compile_context>
chip_gen: v7x
topology: tpu7x:2x2x1
jax: 0.10.0
libtpu: 0.0.40
codegen_flags: <defaults>
</compile_context>

<pallas_src>
import functools

import jax
import jax.numpy as jnp
from jax.experimental import pallas as pl
from jax.experimental.pallas import tpu as pltpu

EPS = 1e-5


def _round_up(x, m):
  return (x + m - 1) // m * m


def _part_classifier_kernel(f1_ref, f2_ref, gamma_ref, beta_ref, w_ref, b_ref,
                            o1_ref, o2_ref, *, parts_per_step, part_dims):
  """One grid step handles `parts_per_step` parts.

  f1_ref, f2_ref : (B, Pb*D)   column slab of the flat feature batches (f32)
  gamma_ref      : (Pb, 1, D)  BN scale
  beta_ref       : (Pb, 1, D)  BN shift
  w_ref          : (Pb, D, Cp) linear weight, pre-transposed to D x Cp (bf16)
  b_ref          : (Pb, 1, Cp) linear bias (f32)
  o1_ref, o2_ref : (Pb, B, Cp) per-part logits (f32)
  """
  B = f1_ref.shape[0]
  D = part_dims

  # Small static unroll over the parts owned by this grid step.
  for i in range(parts_per_step):
    x1 = f1_ref[:, i * D:(i + 1) * D]          # (B, D) f32 (inputs are f32)
    x2 = f2_ref[:, i * D:(i + 1) * D]
    gamma = gamma_ref[i, 0]                    # (D,)
    beta = beta_ref[i, 0]                      # (D,)
    bias = b_ref[i, 0]                         # (Cp,)
    w = w_ref[i]                               # (D, Cp)

    def bn(x):
      # BatchNorm1d in training mode: batch mean / biased variance per feature.
      mean = jnp.mean(x, axis=0, keepdims=True)
      c = x - mean
      var = jnp.mean(c * c, axis=0, keepdims=True)
      inv = jax.lax.rsqrt(var + EPS)
      return c * inv * gamma[None, :] + beta[None, :]

    # BN stats are computed per input batch (so f1/f2 stay separate for BN),
    # then the two matmuls are fused into one (2B, D) x (D, Cp) MXU pass so the
    # weight tile is pushed once per part instead of twice.
    xn = jnp.concatenate([bn(x1), bn(x2)], axis=0).astype(w.dtype)  # (2B, D)
    y = jnp.dot(xn, w, preferred_element_type=jnp.float32) + bias[None, :]
    o1_ref[i] = y[:B].astype(o1_ref.dtype)
    o2_ref[i] = y[B:].astype(o2_ref.dtype)


@functools.partial(jax.jit, static_argnames=("num_parts", "part_dims"))
def part_classifier_forward(f1, f2, gamma, beta, w, b, *, num_parts,
                            part_dims):
  """f1, f2: [B, num_parts * part_dims] float32.

  gamma, beta: [P, D]; w: [P, D, C] (any float dtype, bf16 recommended);
  b: [P, C].  Returns logits1, logits2 stacked as [P, B, C] float32.
  """
  B = f1.shape[0]
  P, D = num_parts, part_dims
  C = w.shape[-1]
  Cp = _round_up(C, 128)           # lane-dense output stores / MXU tile

  # Zero-pad the class dimension so the output last dim is a multiple of 128.
  if Cp != C:
    w = jnp.pad(w, ((0, 0), (0, 0), (0, Cp - C)))
    b = jnp.pad(b, ((0, 0), (0, Cp - C)))

  # Parts per grid step: keep 2 parallel steps when possible (dual-TC v7x can
  # shard them), which also amortizes per-step overhead on single-TC v5e/v6e.
  num_steps = 2 if (P % 2 == 0 and P >= 2) else 1
  Pb = P // num_steps

  gamma3 = gamma.reshape(P, 1, D).astype(jnp.float32)
  beta3 = beta.reshape(P, 1, D).astype(jnp.float32)
  b3 = b.reshape(P, 1, Cp).astype(jnp.float32)

  # Column-selecting BlockSpec: block index p picks part columns directly from
  # the flat [B, P*D] arrays -- no wrapper transpose / HBM copy.
  feat_spec = pl.BlockSpec((B, Pb * D), lambda p: (0, p))
  vec_d_spec = pl.BlockSpec((Pb, 1, D), lambda p: (p, 0, 0))
  w_spec = pl.BlockSpec((Pb, D, Cp), lambda p: (p, 0, 0))
  vec_c_spec = pl.BlockSpec((Pb, 1, Cp), lambda p: (p, 0, 0))
  out_spec = pl.BlockSpec((Pb, B, Cp), lambda p: (p, 0, 0))

  itemsize_f = f1.dtype.itemsize
  bytes_accessed = (
      (f1.size + f2.size) * itemsize_f           # feature reads
      + w.size * w.dtype.itemsize                # weights (bf16 if stored so)
      + (gamma3.size + beta3.size + b3.size) * 4
      + 2 * P * B * Cp * 4)                      # logits writes
  cost = pl.CostEstimate(
      flops=2 * P * (2 * B) * D * Cp,
      transcendentals=2 * P * D,                 # rsqrt per feature per batch
      bytes_accessed=int(bytes_accessed))

  kernel = functools.partial(
      _part_classifier_kernel, parts_per_step=Pb, part_dims=D)

  logits1, logits2 = pl.pallas_call(
      kernel,
      out_shape=(
          jax.ShapeDtypeStruct((P, B, Cp), jnp.float32),
          jax.ShapeDtypeStruct((P, B, Cp), jnp.float32),
      ),
      grid_spec=pltpu.PrefetchScalarGridSpec(
          num_scalar_prefetch=0,
          grid=(num_steps,),
          in_specs=[feat_spec, feat_spec, vec_d_spec, vec_d_spec, w_spec,
                    vec_c_spec],
          out_specs=[out_spec, out_spec],
      ),
      compiler_params=pltpu.CompilerParams(
          dimension_semantics=("parallel",),
          vmem_limit_bytes=32 * 1024 * 1024),
      cost_estimate=cost,
  )(f1, f2, gamma3, beta3, w, b3)

  if Cp != C:
    logits1 = logits1[..., :C]
    logits2 = logits2[..., :C]
  return logits1, logits2


def _reference_forward(f1, f2, gamma, beta, w, b, num_parts, part_dims):
  """Pure-JAX reference of the PyTorch forward (training-mode BN), f32."""
  outs1, outs2 = [], []
  w32 = w.astype(jnp.float32)
  for p in range(num_parts):
    sl = slice(p * part_dims, (p + 1) * part_dims)

    def bn_lin(x):
      mean = jnp.mean(x, axis=0, keepdims=True)
      var = jnp.mean((x - mean) ** 2, axis=0, keepdims=True)
      xn = (x - mean) / jnp.sqrt(var + EPS)
      xn = xn * gamma[p][None, :] + beta[p][None, :]
      return xn @ w32[p] + b[p][None, :]

    outs1.append(bn_lin(f1[:, sl]))
    outs2.append(bn_lin(f2[:, sl]))
  return jnp.stack(outs1, 0), jnp.stack(outs2, 0)


if __name__ == "__main__":
  # Small TPU-friendly shapes consistent with the module's defaults
  # (num_parts=6 / part_dims=256 / num_class=751, scaled down).
  # NUM_CLASS=200 deliberately exercises the lane-padding path (200 -> 256).
  NUM_PARTS = 4
  PART_DIMS = 128
  NUM_CLASS = 200
  BATCH = 8

  key = jax.random.PRNGKey(0)
  k_f1, k_f2, k_w = jax.random.split(key, 3)

  f1 = jax.random.normal(k_f1, (BATCH, NUM_PARTS * PART_DIMS), jnp.float32)
  f2 = jax.random.normal(k_f2, (BATCH, NUM_PARTS * PART_DIMS), jnp.float32)

  # Deterministic parameter init, mirroring make_classifier():
  #   BN weight = 1, BN bias = 0; Linear weight ~ N(0, 0.001), bias = 0.
  gamma = jnp.ones((NUM_PARTS, PART_DIMS), jnp.float32)
  beta = jnp.zeros((NUM_PARTS, PART_DIMS), jnp.float32)
  w_f32 = 0.001 * jax.random.normal(
      k_w, (NUM_PARTS, PART_DIMS, NUM_CLASS), jnp.float32)  # stored as (D, C)
  b = jnp.zeros((NUM_PARTS, NUM_CLASS), jnp.float32)

  # Classifier weights are stored in bf16 (halves W's HBM traffic); accumulate
  # stays f32 inside the kernel.
  w_bf16 = w_f32.astype(jnp.bfloat16)

  logits1, logits2 = part_classifier_forward(
      f1, f2, gamma, beta, w_bf16, b, num_parts=NUM_PARTS,
      part_dims=PART_DIMS)
  jax.block_until_ready((logits1, logits2))

  # Compare against an f32 reference using the same bf16-rounded weights
  # (isolates the remaining error to bf16 activation rounding in the MXU).
  ref1, ref2 = _reference_forward(f1, f2, gamma, beta, w_bf16, b, NUM_PARTS,
                                  PART_DIMS)
  assert jnp.allclose(logits1, ref1, atol=5e-4, rtol=5e-2)
  assert jnp.allclose(logits2, ref2, atol=5e-4, rtol=5e-2)
  assert logits1.shape == (NUM_PARTS, BATCH, NUM_CLASS)

  # The PyTorch module returns python lists of per-part logits; the list
  # equivalent here is simply [logits1[p] for p in range(NUM_PARTS)].
  print("KERNEL_OK")
</pallas_src>

<mosaic_0001>
module attributes {stable_mosaic.version = 11 : i64} {
  func.func @_part_classifier_kernel(%arg0: i32, %arg1: memref<8x256xf32, #tpu.memory_space<vmem>>, %arg2: memref<8x256xf32, #tpu.memory_space<vmem>>, %arg3: memref<2x1x128xf32, #tpu.memory_space<vmem>>, %arg4: memref<2x1x128xf32, #tpu.memory_space<vmem>>, %arg5: memref<2x128x256xbf16, #tpu.memory_space<vmem>>, %arg6: memref<2x1x256xf32, #tpu.memory_space<vmem>>, %arg7: memref<2x8x256xf32, #tpu.memory_space<vmem>>, %arg8: memref<2x8x256xf32, #tpu.memory_space<vmem>>) attributes {dimension_semantics = [#tpu.dimension_semantics<parallel>], iteration_bounds = array<i64: 2>, scalar_prefetch = 0 : i64, scratch_operands = 0 : i64, tpu.core_type = #tpu.core_type<tc>, window_params = [{transform_indices = @transform_0, window_bounds = array<i64: 8, 256>}, {transform_indices = @transform_1, window_bounds = array<i64: 8, 256>}, {transform_indices = @transform_2, window_bounds = array<i64: 2, 1, 128>}, {transform_indices = @transform_3, window_bounds = array<i64: 2, 1, 128>}, {transform_indices = @transform_4, window_bounds = array<i64: 2, 128, 256>}, {transform_indices = @transform_5, window_bounds = array<i64: 2, 1, 256>}, {transform_indices = @transform_6, window_bounds = array<i64: 2, 8, 256>}, {transform_indices = @transform_7, window_bounds = array<i64: 2, 8, 256>}]} {
    %c0 = arith.constant 0 : index
    %c0_0 = arith.constant 0 : index
    %0 = vector.load %arg1[%c0, %c0_0] : memref<8x256xf32, #tpu.memory_space<vmem>>, vector<8x128xf32>
    %c0_1 = arith.constant 0 : index
    %c0_2 = arith.constant 0 : index
    %1 = vector.load %arg2[%c0_1, %c0_2] : memref<8x256xf32, #tpu.memory_space<vmem>>, vector<8x128xf32>
    %c0_3 = arith.constant 0 : index
    %c0_4 = arith.constant 0 : index
    %c0_5 = arith.constant 0 : index
    %2 = vector.load %arg3[%c0_3, %c0_4, %c0_5] : memref<2x1x128xf32, #tpu.memory_space<vmem>>, vector<1x1x128xf32>
    %3 = vector.shape_cast %2 : vector<1x1x128xf32> to vector<128xf32>
    %c0_6 = arith.constant 0 : index
    %c0_7 = arith.constant 0 : index
    %c0_8 = arith.constant 0 : index
    %4 = vector.load %arg4[%c0_6, %c0_7, %c0_8] : memref<2x1x128xf32, #tpu.memory_space<vmem>>, vector<1x1x128xf32>
    %5 = vector.shape_cast %4 : vector<1x1x128xf32> to vector<128xf32>
    %c0_9 = arith.constant 0 : index
    %c0_10 = arith.constant 0 : index
    %c0_11 = arith.constant 0 : index
    %6 = vector.load %arg6[%c0_9, %c0_10, %c0_11] : memref<2x1x256xf32, #tpu.memory_space<vmem>>, vector<1x1x256xf32>
    %7 = vector.shape_cast %6 : vector<1x1x256xf32> to vector<256xf32>
    %c0_12 = arith.constant 0 : index
    %c0_13 = arith.constant 0 : index
    %c0_14 = arith.constant 0 : index
    %8 = vector.load %arg5[%c0_12, %c0_13, %c0_14] : memref<2x128x256xbf16, #tpu.memory_space<vmem>>, vector<1x128x256xbf16>
    %9 = vector.shape_cast %8 : vector<1x128x256xbf16> to vector<128x256xbf16>
    %cst = arith.constant dense<0.000000e+00> : vector<128xf32>
    %10 = vector.multi_reduction <add>, %0, %cst [0] : vector<8x128xf32> to vector<128xf32>
    %11 = vector.shape_cast %10 : vector<128xf32> to vector<1x128xf32>
    %cst_15 = arith.constant 8.000000e+00 : f32
    %12 = vector.broadcast %cst_15 : f32 to vector<1x128xf32>
    %13 = arith.divf %11, %12 : vector<1x128xf32>
    %14 = vector.broadcast %13 : vector<1x128xf32> to vector<8x128xf32>
    %15 = arith.subf %0, %14 : vector<8x128xf32>
    %16 = arith.mulf %15, %15 : vector<8x128xf32>
    %cst_16 = arith.constant dense<0.000000e+00> : vector<128xf32>
    %17 = vector.multi_reduction <add>, %16, %cst_16 [0] : vector<8x128xf32> to vector<128xf32>
    %18 = vector.shape_cast %17 : vector<128xf32> to vector<1x128xf32>
    %cst_17 = arith.constant 8.000000e+00 : f32
    %19 = vector.broadcast %cst_17 : f32 to vector<1x128xf32>
    %20 = arith.divf %18, %19 : vector<1x128xf32>
    %cst_18 = arith.constant 9.99999974E-6 : f32
    %21 = vector.broadcast %cst_18 : f32 to vector<1x128xf32>
    %22 = arith.addf %20, %21 : vector<1x128xf32>
    %23 = math.rsqrt %22 : vector<1x128xf32>
    %24 = vector.broadcast %23 : vector<1x128xf32> to vector<8x128xf32>
    %25 = arith.mulf %15, %24 : vector<8x128xf32>
    %26 = vector.shape_cast %3 : vector<128xf32> to vector<1x128xf32>
    %27 = vector.broadcast %26 : vector<1x128xf32> to vector<8x128xf32>
    %28 = arith.mulf %25, %27 : vector<8x128xf32>
    %29 = vector.shape_cast %5 : vector<128xf32> to vector<1x128xf32>
    %30 = vector.broadcast %29 : vector<1x128xf32> to vector<8x128xf32>
    %31 = arith.addf %28, %30 : vector<8x128xf32>
    %cst_19 = arith.constant dense<0.000000e+00> : vector<128xf32>
    %32 = vector.multi_reduction <add>, %1, %cst_19 [0] : vector<8x128xf32> to vector<128xf32>
    %33 = vector.shape_cast %32 : vector<128xf32> to vector<1x128xf32>
    %cst_20 = arith.constant 8.000000e+00 : f32
    %34 = vector.broadcast %cst_20 : f32 to vector<1x128xf32>
    %35 = arith.divf %33, %34 : vector<1x128xf32>
    %36 = vector.broadcast %35 : vector<1x128xf32> to vector<8x128xf32>
    %37 = arith.subf %1, %36 : vector<8x128xf32>
    %38 = arith.mulf %37, %37 : vector<8x128xf32>
    %cst_21 = arith.constant dense<0.000000e+00> : vector<128xf32>
    %39 = vector.multi_reduction <add>, %38, %cst_21 [0] : vector<8x128xf32> to vector<128xf32>
    %40 = vector.shape_cast %39 : vector<128xf32> to vector<1x128xf32>
    %cst_22 = arith.constant 8.000000e+00 : f32
    %41 = vector.broadcast %cst_22 : f32 to vector<1x128xf32>
    %42 = arith.divf %40, %41 : vector<1x128xf32>
    %cst_23 = arith.constant 9.99999974E-6 : f32
    %43 = vector.broadcast %cst_23 : f32 to vector<1x128xf32>
    %44 = arith.addf %42, %43 : vector<1x128xf32>
    %45 = math.rsqrt %44 : vector<1x128xf32>
    %46 = vector.broadcast %45 : vector<1x128xf32> to vector<8x128xf32>
    %47 = arith.mulf %37, %46 : vector<8x128xf32>
    %48 = vector.shape_cast %3 : vector<128xf32> to vector<1x128xf32>
    %49 = vector.broadcast %48 : vector<1x128xf32> to vector<8x128xf32>
    %50 = arith.mulf %47, %49 : vector<8x128xf32>
    %51 = vector.shape_cast %5 : vector<128xf32> to vector<1x128xf32>
    %52 = vector.broadcast %51 : vector<1x128xf32> to vector<8x128xf32>
    %53 = arith.addf %50, %52 : vector<8x128xf32>
    %54 = tpu.concatenate %31, %53 in 0 : vector<8x128xf32>, vector<8x128xf32> -> vector<16x128xf32>
    %55 = arith.truncf %54 : vector<16x128xf32> to vector<16x128xbf16>
    %cst_24 = arith.constant dense<0.000000e+00> : vector<16x256xf32>
    %56 = tpu.matmul %55, %9, %cst_24 {dimension_numbers = #tpu.dot_dimension_numbers<[1], [0], [0], [1], [0, 0, 1, 1], [], []>} : vector<16x128xbf16>, vector<128x256xbf16>, vector<16x256xf32> -> vector<16x256xf32>
    %57 = vector.shape_cast %7 : vector<256xf32> to vector<1x256xf32>
    %58 = vector.broadcast %57 : vector<1x256xf32> to vector<16x256xf32>
    %59 = arith.addf %56, %58 : vector<16x256xf32>
    %60 = vector.extract_strided_slice %59 {offsets = [0, 0], sizes = [8, 256], strides = [1, 1]} : vector<16x256xf32> to vector<8x256xf32>
    %c0_25 = arith.constant 0 : index
    %c0_26 = arith.constant 0 : index
    %c0_27 = arith.constant 0 : index
    %61 = vector.load %arg7[%c0_25, %c0_26, %c0_27] : memref<2x8x256xf32, #tpu.memory_space<vmem>>, vector<1x8x256xf32>
    %62 = vector.shape_cast %61 : vector<1x8x256xf32> to vector<8x256xf32>
    %63 = vector.shape_cast %60 : vector<8x256xf32> to vector<1x8x256xf32>
    tpu.vector_store %arg7[%c0_25, %c0_26, %c0_27], %63 {strides = array<i32>} : memref<2x8x256xf32, #tpu.memory_space<vmem>>, vector<1x8x256xf32>,
    %64 = vector.extract_strided_slice %59 {offsets = [8, 0], sizes = [8, 256], strides = [1, 1]} : vector<16x256xf32> to vector<8x256xf32>
    %c0_28 = arith.constant 0 : index
    %c0_29 = arith.constant 0 : index
    %c0_30 = arith.constant 0 : index
    %65 = vector.load %arg8[%c0_28, %c0_29, %c0_30] : memref<2x8x256xf32, #tpu.memory_space<vmem>>, vector<1x8x256xf32>
    %66 = vector.shape_cast %65 : vector<1x8x256xf32> to vector<8x256xf32>
    %67 = vector.shape_cast %64 : vector<8x256xf32> to vector<1x8x256xf32>
    tpu.vector_store %arg8[%c0_28, %c0_29, %c0_30], %67 {strides = array<i32>} : memref<2x8x256xf32, #tpu.memory_space<vmem>>, vector<1x8x256xf32>,
    %c0_31 = arith.constant 0 : index
    %c128 = arith.constant 128 : index
    %68 = vector.load %arg1[%c0_31, %c128] : memref<8x256xf32, #tpu.memory_space<vmem>>, vector<8x128xf32>
    %c0_32 = arith.constant 0 : index
    %c128_33 = arith.constant 128 : index
    %69 = vector.load %arg2[%c0_32, %c128_33] : memref<8x256xf32, #tpu.memory_space<vmem>>, vector<8x128xf32>
    %c1 = arith.constant 1 : index
    %c0_34 = arith.constant 0 : index
    %c0_35 = arith.constant 0 : index
    %70 = vector.load %arg3[%c1, %c0_34, %c0_35] : memref<2x1x128xf32, #tpu.memory_space<vmem>>, vector<1x1x128xf32>
    %71 = vector.shape_cast %70 : vector<1x1x128xf32> to vector<128xf32>
    %c1_36 = arith.constant 1 : index
    %c0_37 = arith.constant 0 : index
    %c0_38 = arith.constant 0 : index
    %72 = vector.load %arg4[%c1_36, %c0_37, %c0_38] : memref<2x1x128xf32, #tpu.memory_space<vmem>>, vector<1x1x128xf32>
    %73 = vector.shape_cast %72 : vector<1x1x128xf32> to vector<128xf32>
    %c1_39 = arith.constant 1 : index
    %c0_40 = arith.constant 0 : index
    %c0_41 = arith.constant 0 : index
    %74 = vector.load %arg6[%c1_39, %c0_40, %c0_41] : memref<2x1x256xf32, #tpu.memory_space<vmem>>, vector<1x1x256xf32>
    %75 = vector.shape_cast %74 : vector<1x1x256xf32> to vector<256xf32>
    %c1_42 = arith.constant 1 : index
    %c0_43 = arith.constant 0 : index
    %c0_44 = arith.constant 0 : index
    %76 = vector.load %arg5[%c1_42, %c0_43, %c0_44] : memref<2x128x256xbf16, #tpu.memory_space<vmem>>, vector<1x128x256xbf16>
    %77 = vector.shape_cast %76 : vector<1x128x256xbf16> to vector<128x256xbf16>
    %cst_45 = arith.constant dense<0.000000e+00> : vector<128xf32>
    %78 = vector.multi_reduction <add>, %68, %cst_45 [0] : vector<8x128xf32> to vector<128xf32>
    %79 = vector.shape_cast %78 : vector<128xf32> to vector<1x128xf32>
    %cst_46 = arith.constant 8.000000e+00 : f32
    %80 = vector.broadcast %cst_46 : f32 to vector<1x128xf32>
    %81 = arith.divf %79, %80 : vector<1x128xf32>
    %82 = vector.broadcast %81 : vector<1x128xf32> to vector<8x128xf32>
    %83 = arith.subf %68, %82 : vector<8x128xf32>
    %84 = arith.mulf %83, %83 : vector<8x128xf32>
    %cst_47 = arith.constant dense<0.000000e+00> : vector<128xf32>
    %85 = vector.multi_reduction <add>, %84, %cst_47 [0] : vector<8x128xf32> to vector<128xf32>
    %86 = vector.shape_cast %85 : vector<128xf32> to vector<1x128xf32>
    %cst_48 = arith.constant 8.000000e+00 : f32
    %87 = vector.broadcast %cst_48 : f32 to vector<1x128xf32>
    %88 = arith.divf %86, %87 : vector<1x128xf32>
    %cst_49 = arith.constant 9.99999974E-6 : f32
    %89 = vector.broadcast %cst_49 : f32 to vector<1x128xf32>
    %90 = arith.addf %88, %89 : vector<1x128xf32>
    %91 = math.rsqrt %90 : vector<1x128xf32>
    %92 = vector.broadcast %91 : vector<1x128xf32> to vector<8x128xf32>
    %93 = arith.mulf %83, %92 : vector<8x128xf32>
    %94 = vector.shape_cast %71 : vector<128xf32> to vector<1x128xf32>
    %95 = vector.broadcast %94 : vector<1x128xf32> to vector<8x128xf32>
    %96 = arith.mulf %93, %95 : vector<8x128xf32>
    %97 = vector.shape_cast %73 : vector<128xf32> to vector<1x128xf32>
    %98 = vector.broadcast %97 : vector<1x128xf32> to vector<8x128xf32>
    %99 = arith.addf %96, %98 : vector<8x128xf32>
    %cst_50 = arith.constant dense<0.000000e+00> : vector<128xf32>
    %100 = vector.multi_reduction <add>, %69, %cst_50 [0] : vector<8x128xf32> to vector<128xf32>
    %101 = vector.shape_cast %100 : vector<128xf32> to vector<1x128xf32>
    %cst_51 = arith.constant 8.000000e+00 : f32
    %102 = vector.broadcast %cst_51 : f32 to vector<1x128xf32>
    %103 = arith.divf %101, %102 : vector<1x128xf32>
    %104 = vector.broadcast %103 : vector<1x128xf32> to vector<8x128xf32>
    %105 = arith.subf %69, %104 : vector<8x128xf32>
    %106 = arith.mulf %105, %105 : vector<8x128xf32>
    %cst_52 = arith.constant dense<0.000000e+00> : vector<128xf32>
    %107 = vector.multi_reduction <add>, %106, %cst_52 [0] : vector<8x128xf32> to vector<128xf32>
    %108 = vector.shape_cast %107 : vector<128xf32> to vector<1x128xf32>
    %cst_53 = arith.constant 8.000000e+00 : f32
    %109 = vector.broadcast %cst_53 : f32 to vector<1x128xf32>
    %110 = arith.divf %108, %109 : vector<1x128xf32>
    %cst_54 = arith.constant 9.99999974E-6 : f32
    %111 = vector.broadcast %cst_54 : f32 to vector<1x128xf32>
    %112 = arith.addf %110, %111 : vector<1x128xf32>
    %113 = math.rsqrt %112 : vector<1x128xf32>
    %114 = vector.broadcast %113 : vector<1x128xf32> to vector<8x128xf32>
    %115 = arith.mulf %105, %114 : vector<8x128xf32>
    %116 = vector.shape_cast %71 : vector<128xf32> to vector<1x128xf32>
    %117 = vector.broadcast %116 : vector<1x128xf32> to vector<8x128xf32>
    %118 = arith.mulf %115, %117 : vector<8x128xf32>
    %119 = vector.shape_cast %73 : vector<128xf32> to vector<1x128xf32>
    %120 = vector.broadcast %119 : vector<1x128xf32> to vector<8x128xf32>
    %121 = arith.addf %118, %120 : vector<8x128xf32>
    %122 = tpu.concatenate %99, %121 in 0 : vector<8x128xf32>, vector<8x128xf32> -> vector<16x128xf32>
    %123 = arith.truncf %122 : vector<16x128xf32> to vector<16x128xbf16>
    %cst_55 = arith.constant dense<0.000000e+00> : vector<16x256xf32>
    %124 = tpu.matmul %123, %77, %cst_55 {dimension_numbers = #tpu.dot_dimension_numbers<[1], [0], [0], [1], [0, 0, 1, 1], [], []>} : vector<16x128xbf16>, vector<128x256xbf16>, vector<16x256xf32> -> vector<16x256xf32>
    %125 = vector.shape_cast %75 : vector<256xf32> to vector<1x256xf32>
    %126 = vector.broadcast %125 : vector<1x256xf32> to vector<16x256xf32>
    %127 = arith.addf %124, %126 : vector<16x256xf32>
    %128 = vector.extract_strided_slice %127 {offsets = [0, 0], sizes = [8, 256], strides = [1, 1]} : vector<16x256xf32> to vector<8x256xf32>
    %c1_56 = arith.constant 1 : index
    %c0_57 = arith.constant 0 : index
    %c0_58 = arith.constant 0 : index
    %129 = vector.load %arg7[%c1_56, %c0_57, %c0_58] : memref<2x8x256xf32, #tpu.memory_space<vmem>>, vector<1x8x256xf32>
    %130 = vector.shape_cast %129 : vector<1x8x256xf32> to vector<8x256xf32>
    %131 = vector.shape_cast %128 : vector<8x256xf32> to vector<1x8x256xf32>
    tpu.vector_store %arg7[%c1_56, %c0_57, %c0_58], %131 {strides = array<i32>} : memref<2x8x256xf32, #tpu.memory_space<vmem>>, vector<1x8x256xf32>,
    %132 = vector.extract_strided_slice %127 {offsets = [8, 0], sizes = [8, 256], strides = [1, 1]} : vector<16x256xf32> to vector<8x256xf32>
    %c1_59 = arith.constant 1 : index
    %c0_60 = arith.constant 0 : index
    %c0_61 = arith.constant 0 : index
    %133 = vector.load %arg8[%c1_59, %c0_60, %c0_61] : memref<2x8x256xf32, #tpu.memory_space<vmem>>, vector<1x8x256xf32>
    %134 = vector.shape_cast %133 : vector<1x8x256xf32> to vector<8x256xf32>
    %135 = vector.shape_cast %132 : vector<8x256xf32> to vector<1x8x256xf32>
    tpu.vector_store %arg8[%c1_59, %c0_60, %c0_61], %135 {strides = array<i32>} : memref<2x8x256xf32, #tpu.memory_space<vmem>>, vector<1x8x256xf32>,
    return
  }
  func.func @transform_0(%arg0: i32) -> (i32, i32) {
    %c0_i32 = arith.constant 0 : i32
    %c0_i32_0 = arith.constant 0 : i32
    return %c0_i32, %arg0 : i32, i32
  }
  func.func @transform_1(%arg0: i32) -> (i32, i32) {
    %c0_i32 = arith.constant 0 : i32
    %c0_i32_0 = arith.constant 0 : i32
    return %c0_i32, %arg0 : i32, i32
  }
  func.func @transform_2(%arg0: i32) -> (i32, i32, i32) {
    %c0_i32 = arith.constant 0 : i32
    %c0_i32_0 = arith.constant 0 : i32
    %c0_i32_1 = arith.constant 0 : i32
    return %arg0, %c0_i32, %c0_i32_0 : i32, i32, i32
  }
  func.func @transform_3(%arg0: i32) -> (i32, i32, i32) {
    %c0_i32 = arith.constant 0 : i32
    %c0_i32_0 = arith.constant 0 : i32
    %c0_i32_1 = arith.constant 0 : i32
    return %arg0, %c0_i32, %c0_i32_0 : i32, i32, i32
  }
  func.func @transform_4(%arg0: i32) -> (i32, i32, i32) {
    %c0_i32 = arith.constant 0 : i32
    %c0_i32_0 = arith.constant 0 : i32
    %c0_i32_1 = arith.constant 0 : i32
    return %arg0, %c0_i32, %c0_i32_0 : i32, i32, i32
  }
  func.func @transform_5(%arg0: i32) -> (i32, i32, i32) {
    %c0_i32 = arith.constant 0 : i32
    %c0_i32_0 = arith.constant 0 : i32
    %c0_i32_1 = arith.constant 0 : i32
    return %arg0, %c0_i32, %c0_i32_0 : i32, i32, i32
  }
  func.func @transform_6(%arg0: i32) -> (i32, i32, i32) {
    %c0_i32 = arith.constant 0 : i32
    %c0_i32_0 = arith.constant 0 : i32
    %c0_i32_1 = arith.constant 0 : i32
    return %arg0, %c0_i32, %c0_i32_0 : i32, i32, i32
  }
  func.func @transform_7(%arg0: i32) -> (i32, i32, i32) {
    %c0_i32 = arith.constant 0 : i32
    %c0_i32_0 = arith.constant 0 : i32
    %c0_i32_1 = arith.constant 0 : i32
    return %arg0, %c0_i32, %c0_i32_0 : i32, i32, i32
  }
}

</mosaic_0001>

<llo_original>
// kernel: part_classifier_forward.1
$region0: #{part_classifier_forward.1}
  #allocation0 [shape = 'u32[]', space=smem, size = 0x4, offset = 0x4, fixed_abs, tag = 'smem constant byte address 0x4 - core index']
  #allocation1 [shape = 'u32[144,128]{1,0:T(1,128)}', space=vmem, size = 0x12000, scoped, tag = 'internal scratch']
  %s0 = inlined_call_operand.vmem [shape: f32[8,512], index: 0, kind: input, shape index: {}]
  %s1 = inlined_call_operand.vmem [shape: f32[8,512], index: 1, kind: input, shape index: {}]
  %s2 = inlined_call_operand.vmem [shape: f32[4,1,128], index: 2, kind: input, shape index: {}]
  %s3 = inlined_call_operand.vmem [shape: f32[4,1,128], index: 3, kind: input, shape index: {}]
  %s4 = inlined_call_operand.vmem [shape: bf16[4,128,256], index: 4, kind: input, shape index: {}]
  %s5 = inlined_call_operand.vmem [shape: f32[4,1,256], index: 5, kind: input, shape index: {}]
  %s6 = inlined_call_operand.hbm [shape: f32[4,8,256], index: 6, kind: output, shape index: {0}]
  %s7 = inlined_call_operand.hbm [shape: f32[4,8,256], index: 7, kind: output, shape index: {1}]
  %8 = xla_tuple %s6, %s7
  %s9 = sld [smem:[#allocation0]]
  $region65: #{part_classifier_forward.1} parent=0
    _
  %s11 = ssub.s32 1, %s9
  %s12 = scalar_select 0, %s11, %s9
  $region1: #{part_classifier_forward.1} parent=0
    #allocation2 [shape = 'u8[32768]{0}', space=vmem, size = 0x8000, scoped, tag = 'output window, operand 0']
    #allocation3 [shape = 's32[2]{0}', space=sflag, size = 0x8, scoped, tag = 'scoped memory for part_classifier_forward.1']
    #allocation4 [shape = 'u8[32768]{0}', space=vmem, size = 0x8000, scoped, tag = 'output window, operand 1']
    #allocation5 [shape = 's32[2]{0}', space=sflag, size = 0x8, scoped, tag = 'scoped memory for part_classifier_forward.1']
    %13 = vsyncpa [#allocation3], 0
    %s14 = scalar_lea.sflag [#allocation3], 1
    %15 = vsyncpa %s14, 0
    %16 = vsyncpa [#allocation5], 0
    %s17 = scalar_lea.sflag [#allocation5], 1
    %18 = vsyncpa %s17, 0
    loop: start=0, step=1, limit=4
    $region2: #{part_classifier_forward.1} parent=1 // loop_pre_header
      _
    $region3: #{part_classifier_forward.1} parent=1 // loop_header
      %s20 = sphi 0, %s24
      %p21 = scmp.ge.s32.totalorder %s20, 4
      %s30 = sphi 0, %s32
      %s33 = sphi 0, %s30
      %s34 = sphi 0, %s33
      %s50 = sphi 0, %s34
      %s56 = sphi 0, %s58
      %s59 = sphi 0, %s56
      %s60 = sphi 0, %s59
      %s76 = sphi 0, %s60
      %s82 = sphi 0, %s84
      %s85 = sphi 0, %s82
      %s86 = sphi 0, %s85
      %s102 = sphi 0, %s86
      %s108 = sphi 0, %s110
      %s111 = sphi 0, %s108
      %s112 = sphi 0, %s111
      %s128 = sphi 0, %s112
      %s134 = sphi 0, %s136
      %s137 = sphi 0, %s134
      %s138 = sphi 0, %s137
      %s154 = sphi 0, %s138
      %s160 = sphi 0, %s162
      %s163 = sphi 0, %s160
      %s164 = sphi 0, %s163
      %s180 = sphi 0, %s164
      %s186 = sphi 0, %s188
      %s189 = sphi 0, %s186
      %s190 = sphi 0, %s189
      %s206 = sphi 0, %s190
      %s212 = sphi 0, %s214
      %s215 = sphi 0, %s212
      %s216 = sphi 0, %s215
      %s232 = sphi 0, %s216
    $region4: #{part_classifier_forward.1} parent=1 // loop_header_branch
      %23 = sbr.rel (%p21) target = $region8
    $region5: #{part_classifier_forward.1} parent=1 // loop_body
      %s25 = ssub.s32 %s20, 1
      %s26 = ssub.s32 %s20, 2
      %s27 = sadd.s32 %s20, 1
      %s28 = ssub.s32 %s20, %s27
      %p29 = scmp.eq.s32.totalorder %s28, 0
      %s31 = sadd.s32 %s30, 1
      %s32 = scalar_select %p29, %s30, %s31
      %p35 = pneg %p29
      %p36 = scmp.eq.s32.totalorder %s20, 1
      %p37 = por %p35, %p36
      %p38 = scmp.ne.s32.totalorder %s30, %s33
      %p39 = scmp.eq.s32.totalorder %s20, 0
      %p40 = por %p38, %p39
      %p41 = scmp.ne.s32.totalorder %s30, %s33
      %p42 = scmp.eq.s32.totalorder %s25, 1
      %p43 = por %p41, %p42
      %p44 = scmp.ne.s32.totalorder %s33, %s34
      %p45 = scmp.eq.s32.totalorder %s25, 0
      %p46 = por %p44, %p45
      %p47 = scmp.ne.s32.totalorder %s33, %s34
      %p48 = scmp.eq.s32.totalorder %s26, 1
      %p49 = por %p47, %p48
      %p51 = scmp.ne.s32.totalorder %s34, %s50
      %p52 = scmp.eq.s32.totalorder %s26, 0
      %p53 = por %p51, %p52
      %s54 = ssub.s32 %s20, %s27
      %p55 = scmp.eq.s32.totalorder %s54, 0
      %s57 = sadd.s32 %s56, 1
      %s58 = scalar_select %p55, %s56, %s57
      %p61 = pneg %p55
      %p62 = scmp.eq.s32.totalorder %s20, 1
      %p63 = por %p61, %p62
      %p64 = scmp.ne.s32.totalorder %s56, %s59
      %p65 = scmp.eq.s32.totalorder %s20, 0
      %p66 = por %p64, %p65
      %p67 = scmp.ne.s32.totalorder %s56, %s59
      %p68 = scmp.eq.s32.totalorder %s25, 1
      %p69 = por %p67, %p68
      %p70 = scmp.ne.s32.totalorder %s59, %s60
      %p71 = scmp.eq.s32.totalorder %s25, 0
      %p72 = por %p70, %p71
      %p73 = scmp.ne.s32.totalorder %s59, %s60
      %p74 = scmp.eq.s32.totalorder %s26, 1
      %p75 = por %p73, %p74
      %p77 = scmp.ne.s32.totalorder %s60, %s76
      %p78 = scmp.eq.s32.totalorder %s26, 0
      %p79 = por %p77, %p78
      %s80 = ssub.s32 %s20, %s27
      %p81 = scmp.eq.s32.totalorder %s80, 0
      %s83 = sadd.s32 %s82, 1
      %s84 = scalar_select %p81, %s82, %s83
      %p87 = pneg %p81
      %p88 = scmp.eq.s32.totalorder %s20, 1
      %p89 = por %p87, %p88
      %p90 = scmp.ne.s32.totalorder %s82, %s85
      %p91 = scmp.eq.s32.totalorder %s20, 0
      %p92 = por %p90, %p91
      %p93 = scmp.ne.s32.totalorder %s82, %s85
      %p94 = scmp.eq.s32.totalorder %s25, 1
      %p95 = por %p93, %p94
      %p96 = scmp.ne.s32.totalorder %s85, %s86
      %p97 = scmp.eq.s32.totalorder %s25, 0
      %p98 = por %p96, %p97
      %p99 = scmp.ne.s32.totalorder %s85, %s86
      %p100 = scmp.eq.s32.totalorder %s26, 1
      %p101 = por %p99, %p100
      %p103 = scmp.ne.s32.totalorder %s86, %s102
      %p104 = scmp.eq.s32.totalorder %s26, 0
      %p105 = por %p103, %p104
      %s106 = ssub.s32 %s20, %s27
      %p107 = scmp.eq.s32.totalorder %s106, 0
      %s109 = sadd.s32 %s108, 1
      %s110 = scalar_select %p107, %s108, %s109
      %p113 = pneg %p107
      %p114 = scmp.eq.s32.totalorder %s20, 1
      %p115 = por %p113, %p114
      %p116 = scmp.ne.s32.totalorder %s108, %s111
      %p117 = scmp.eq.s32.totalorder %s20, 0
      %p118 = por %p116, %p117
      %p119 = scmp.ne.s32.totalorder %s108, %s111
      %p120 = scmp.eq.s32.totalorder %s25, 1
      %p121 = por %p119, %p120
      %p122 = scmp.ne.s32.totalorder %s111, %s112
      %p123 = scmp.eq.s32.totalorder %s25, 0
      %p124 = por %p122, %p123
      %p125 = scmp.ne.s32.totalorder %s111, %s112
      %p126 = scmp.eq.s32.totalorder %s26, 1
      %p127 = por %p125, %p126
      %p129 = scmp.ne.s32.totalorder %s112, %s128
      %p130 = scmp.eq.s32.totalorder %s26, 0
      %p131 = por %p129, %p130
      %s132 = ssub.s32 %s20, %s27
      %p133 = scmp.eq.s32.totalorder %s132, 0
      %s135 = sadd.s32 %s134, 1
      %s136 = scalar_select %p133, %s134, %s135
      %p139 = pneg %p133
      %p140 = scmp.eq.s32.totalorder %s20, 1
      %p141 = por %p139, %p140
      %p142 = scmp.ne.s32.totalorder %s134, %s137
      %p143 = scmp.eq.s32.totalorder %s20, 0
      %p144 = por %p142, %p143
      %p145 = scmp.ne.s32.totalorder %s134, %s137
      %p146 = scmp.eq.s32.totalorder %s25, 1
      %p147 = por %p145, %p146
      %p148 = scmp.ne.s32.totalorder %s137, %s138
      %p149 = scmp.eq.s32.totalorder %s25, 0
      %p150 = por %p148, %p149
      %p151 = scmp.ne.s32.totalorder %s137, %s138
      %p152 = scmp.eq.s32.totalorder %s26, 1
      %p153 = por %p151, %p152
      %p155 = scmp.ne.s32.totalorder %s138, %s154
      %p156 = scmp.eq.s32.totalorder %s26, 0
      %p157 = por %p155, %p156
      %s158 = ssub.s32 %s20, %s27
      %p159 = scmp.eq.s32.totalorder %s158, 0
      %s161 = sadd.s32 %s160, 1
      %s162 = scalar_select %p159, %s160, %s161
      %p165 = pneg %p159
      %p166 = scmp.eq.s32.totalorder %s20, 1
      %p167 = por %p165, %p166
      %p168 = scmp.ne.s32.totalorder %s160, %s163
      %p169 = scmp.eq.s32.totalorder %s20, 0
      %p170 = por %p168, %p169
      %p171 = scmp.ne.s32.totalorder %s160, %s163
      %p172 = scmp.eq.s32.totalorder %s25, 1
      %p173 = por %p171, %p172
      %p174 = scmp.ne.s32.totalorder %s163, %s164
      %p175 = scmp.eq.s32.totalorder %s25, 0
      %p176 = por %p174, %p175
      %p177 = scmp.ne.s32.totalorder %s163, %s164
      %p178 = scmp.eq.s32.totalorder %s26, 1
      %p179 = por %p177, %p178
      %p181 = scmp.ne.s32.totalorder %s164, %s180
      %p182 = scmp.eq.s32.totalorder %s26, 0
      %p183 = por %p181, %p182
      %s184 = ssub.s32 %s20, %s27
      %p185 = scmp.eq.s32.totalorder %s184, 0
      %s187 = sadd.s32 %s186, 1
      %s188 = scalar_select %p185, %s186, %s187
      %p191 = pneg %p185
      %p192 = scmp.eq.s32.totalorder %s20, 1
      %p193 = por %p191, %p192
      %p194 = scmp.ne.s32.totalorder %s186, %s189
      %p195 = scmp.eq.s32.totalorder %s20, 0
      %p196 = por %p194, %p195
      %p197 = scmp.ne.s32.totalorder %s186, %s189
      %p198 = scmp.eq.s32.totalorder %s25, 1
      %p199 = por %p197, %p198
      %p200 = scmp.ne.s32.totalorder %s189, %s190
      %p201 = scmp.eq.s32.totalorder %s25, 0
      %p202 = por %p200, %p201
      %p203 = scmp.ne.s32.totalorder %s189, %s190
      %p204 = scmp.eq.s32.totalorder %s26, 1
      %p205 = por %p203, %p204
      %p207 = scmp.ne.s32.totalorder %s190, %s206
      %p208 = scmp.eq.s32.totalorder %s26, 0
      %p209 = por %p207, %p208
      %s210 = ssub.s32 %s20, %s27
      %p211 = scmp.eq.s32.totalorder %s210, 0
      %s213 = sadd.s32 %s212, 1
      %s214 = scalar_select %p211, %s212, %s213
      %p217 = pneg %p211
      %p218 = scmp.eq.s32.totalorder %s20, 1
      %p219 = por %p217, %p218
      %p220 = scmp.ne.s32.totalorder %s212, %s215
      %p221 = scmp.eq.s32.totalorder %s20, 0
      %p222 = por %p220, %p221
      %p223 = scmp.ne.s32.totalorder %s212, %s215
      %p224 = scmp.eq.s32.totalorder %s25, 1
      %p225 = por %p223, %p224
      %p226 = scmp.ne.s32.totalorder %s215, %s216
      %p227 = scmp.eq.s32.totalorder %s25, 0
      %p228 = por %p226, %p227
      %p229 = scmp.ne.s32.totalorder %s215, %s216
      %p230 = scmp.eq.s32.totalorder %s26, 1
      %p231 = por %p229, %p230
      %p233 = scmp.ne.s32.totalorder %s216, %s232
      %p234 = scmp.eq.s32.totalorder %s26, 0
      %p235 = por %p233, %p234
      %p236 = scmp.le.s32.totalorder 1, %s20
      %p237 = scmp.lt.s32.totalorder %s20, 3
      %p238 = pnand %p236, %p237
      %p239 = pneg %p238
      // Predicated region
      $region9: #{part_classifier_forward.1} parent=5 // pred_check
        _
      $region10: #{part_classifier_forward.1} parent=5 // pred_check_branch
        %241 = sbr.rel (%p238) target = $region12
      $region11: #{part_classifier_forward.1} parent=5 // pred_region
        %s242 = ssub.s32 %s20, 1
      $region12: #{part_classifier_forward.1} parent=5 // pred_fallthru
        _
      %p243 = scmp.lt.s32.totalorder %s20, 2
      // Predicated region
      $region13: #{part_classifier_forward.1} parent=5 // pred_check
        %p244 = pneg %p243
      $region14: #{part_classifier_forward.1} parent=5 // pred_check_branch
        %246 = sbr.rel (%p244) target = $region16
      $region15: #{part_classifier_forward.1} parent=5 // pred_region
        // Predicated region
        $region17: #{part_classifier_forward.1} parent=15 // pred_check
          %p247 = pneg %p40
        $region18: #{part_classifier_forward.1} parent=15 // pred_check_branch
          %249 = sbr.rel (%p247) target = $region20
        $region19: #{part_classifier_forward.1} parent=15 // pred_region
          %s250 = smul.u32 2, %s20
          %p251 = scmp.lt.s32.totalorder %s250, 3
          %s252 = scalar_select %p251, %s250, 3
          %s253 = smul.addr %s252, 8
          %s254 = scalar_lea.vmem %s0, %s253
          %s255 = smul.u32 2, %s20
        $region20: #{part_classifier_forward.1} parent=15 // pred_fallthru
          _
        // Predicated region
        $region21: #{part_classifier_forward.1} parent=15 // pred_check
          %p256 = pneg %p66
        $region22: #{part_classifier_forward.1} parent=15 // pred_check_branch
          %258 = sbr.rel (%p256) target = $region24
        $region23: #{part_classifier_forward.1} parent=15 // pred_region
          %s259 = smul.u32 2, %s20
          %p260 = scmp.lt.s32.totalorder %s259, 3
          %s261 = scalar_select %p260, %s259, 3
          %s262 = smul.addr %s261, 8
          %s263 = scalar_lea.vmem %s1, %s262
          %s264 = smul.u32 2, %s20
        $region24: #{part_classifier_forward.1} parent=15 // pred_fallthru
          _
        // Predicated region
        $region25: #{part_classifier_forward.1} parent=15 // pred_check
          %p265 = pneg %p92
        $region26: #{part_classifier_forward.1} parent=15 // pred_check_branch
          %267 = sbr.rel (%p265) target = $region28
        $region27: #{part_classifier_forward.1} parent=15 // pred_region
          %s268 = smul.u32 2, %s20
          %p269 = scmp.lt.s32.totalorder %s268, 3
          %s270 = scalar_select %p269, %s268, 3
          %s271 = scalar_lea.vmem %s2, %s270
          %s272 = smul.u32 2, %s20
        $region28: #{part_classifier_forward.1} parent=15 // pred_fallthru
          _
        // Predicated region
        $region29: #{part_classifier_forward.1} parent=15 // pred_check
          %p273 = pneg %p118
        $region30: #{part_classifier_forward.1} parent=15 // pred_check_branch
          %275 = sbr.rel (%p273) target = $region32
        $region31: #{part_classifier_forward.1} parent=15 // pred_region
          %s276 = smul.u32 2, %s20
          %p277 = scmp.lt.s32.totalorder %s276, 3
          %s278 = scalar_select %p277, %s276, 3
          %s279 = scalar_lea.vmem %s3, %s278
          %s280 = smul.u32 2, %s20
        $region32: #{part_classifier_forward.1} parent=15 // pred_fallthru
          _
        // Predicated region
        $region33: #{part_classifier_forward.1} parent=15 // pred_check
          %p281 = pneg %p144
        $region34: #{part_classifier_forward.1} parent=15 // pred_check_branch
          %283 = sbr.rel (%p281) target = $region36
        $region35: #{part_classifier_forward.1} parent=15 // pred_region
          %s284 = smul.u32 2, %s20
          %p285 = scmp.lt.s32.totalorder %s284, 3
          %s286 = scalar_select %p285, %s284, 3
          %s287 = smul.addr %s286, 32
          %s288 = smul.addr %s287, 4
          %s289 = scalar_lea.vmem %s4, %s288
          %s290 = smul.u32 2, %s20
        $region36: #{part_classifier_forward.1} parent=15 // pred_fallthru
          _
        // Predicated region
        $region37: #{part_classifier_forward.1} parent=15 // pred_check
          %p291 = pneg %p170
        $region38: #{part_classifier_forward.1} parent=15 // pred_check_branch
          %293 = sbr.rel (%p291) target = $region40
        $region39: #{part_classifier_forward.1} parent=15 // pred_region
          %s294 = smul.u32 2, %s20
          %p295 = scmp.lt.s32.totalorder %s294, 3
          %s296 = scalar_select %p295, %s294, 3
          %s297 = smul.addr %s296, 2
          %s298 = scalar_lea.vmem %s5, %s297
          %s299 = smul.u32 2, %s20
        $region40: #{part_classifier_forward.1} parent=15 // pred_fallthru
          _
      $region16: #{part_classifier_forward.1} parent=5 // pred_fallthru
        _
      %p300 = scmp.le.s32.totalorder 1, %s20
      %p301 = scmp.lt.s32.totalorder %s20, 3
      %p302 = pnand %p300, %p301
      %p303 = pneg %p302
      // Predicated region
      $region41: #{part_classifier_forward.1} parent=5 // pred_check
        _
      $region42: #{part_classifier_forward.1} parent=5 // pred_check_branch
        %305 = sbr.rel (%p302) target = $region44
      $region43: #{part_classifier_forward.1} parent=5 // pred_region
        %s306 = ssub.s32 %s20, 1
        %s307 = smul.u32 2, %s25
        %p308 = scmp.lt.s32.totalorder %s307, 3
        %s309 = scalar_select %p308, %s307, 3
        %s310 = smul.addr %s309, 8
        %s311 = scalar_lea.vmem %s0, %s310
        %p312 = pneg %p46
        %p313 = pneg %p43
        %s314 = smul.u32 2, %s25
        %p315 = scmp.lt.s32.totalorder %s314, 3
        %s316 = scalar_select %p315, %s314, 3
        %s317 = smul.addr %s316, 8
        %s318 = scalar_lea.vmem %s1, %s317
        %p319 = pneg %p72
        %p320 = pneg %p69
        %s321 = smul.u32 2, %s25
        %p322 = scmp.lt.s32.totalorder %s321, 3
        %s323 = scalar_select %p322, %s321, 3
        %s324 = scalar_lea.vmem %s2, %s323
        %p325 = pneg %p98
        %p326 = pneg %p95
        %s327 = smul.u32 2, %s25
        %p328 = scmp.lt.s32.totalorder %s327, 3
        %s329 = scalar_select %p328, %s327, 3
        %s330 = scalar_lea.vmem %s3, %s329
        %p331 = pneg %p124
        %p332 = pneg %p121
        %s333 = smul.u32 2, %s25
        %p334 = scmp.lt.s32.totalorder %s333, 3
        %s335 = scalar_select %p334, %s333, 3
        %s336 = smul.addr %s335, 32
        %s337 = smul.addr %s336, 4
        %s338 = scalar_lea.vmem %s4, %s337
        %p339 = pneg %p150
        %p340 = pneg %p147
        %s341 = smul.u32 2, %s25
        %p342 = scmp.lt.s32.totalorder %s341, 3
        %s343 = scalar_select %p342, %s341, 3
        %s344 = smul.addr %s343, 2
        %s345 = scalar_lea.vmem %s5, %s344
        %p346 = pneg %p176
        %p347 = pneg %p173
        %p348 = pneg %p202
        %p349 = pneg %p199
        %s350 = sand.u32 %s189, 1
        %s351 = scalar_lea.sflag [#allocation3], %s350
        %s352 = sand.u32 %s189, 1
        %s353 = smul.addr %s352, 32
        %s354 = scalar_lea.vmem [#allocation2], %s353
        %p355 = pneg %p228
        %p356 = pneg %p225
        %s357 = sand.u32 %s215, 1
        %s358 = scalar_lea.sflag [#allocation5], %s357
        %s359 = sand.u32 %s215, 1
        %s360 = smul.addr %s359, 32
        %s361 = scalar_lea.vmem [#allocation4], %s360
        %s362 = smul.u32 2, %s25
        %p363 = scmp.lt.s32.totalorder %s362, 3
        %s364 = scalar_select %p363, %s362, 3
        %s365 = smul.addr %s364, 8
        %s366 = scalar_lea.vmem %s0, %s365
        %s367 = smul.u32 2, %s25
        %s368 = smul.u32 2, %s25
        %p369 = scmp.lt.s32.totalorder %s368, 3
        %s370 = scalar_select %p369, %s368, 3
        %s371 = smul.addr %s370, 8
        %s372 = scalar_lea.vmem %s1, %s371
        %s373 = smul.u32 2, %s25
        %s374 = smul.u32 2, %s25
        %p375 = scmp.lt.s32.totalorder %s374, 3
        %s376 = scalar_select %p375, %s374, 3
        %s377 = scalar_lea.vmem %s2, %s376
        %s378 = smul.u32 2, %s25
        %s379 = smul.u32 2, %s25
        %p380 = scmp.lt.s32.totalorder %s379, 3
        %s381 = scalar_select %p380, %s379, 3
        %s382 = scalar_lea.vmem %s3, %s381
        %s383 = smul.u32 2, %s25
        %s384 = smul.u32 2, %s25
        %p385 = scmp.lt.s32.totalorder %s384, 3
        %s386 = scalar_select %p385, %s384, 3
        %s387 = smul.addr %s386, 32
        %s388 = smul.addr %s387, 4
        %s389 = scalar_lea.vmem %s4, %s388
        %s390 = smul.u32 2, %s25
        %s391 = smul.u32 2, %s25
        %p392 = scmp.lt.s32.totalorder %s391, 3
        %s393 = scalar_select %p392, %s391, 3
        %s394 = smul.addr %s393, 2
        %s395 = scalar_lea.vmem %s5, %s394
        %s396 = smul.u32 2, %s25
        %s397 = smul.u32 2, %s25
        %s398 = smul.u32 2, %s25
        %v400 = vld [vmem:[%s366] sm:$0xff]
        %v401 = vld [vmem:[%s372] sm:$0xff]
        %v402 = vld [vmem:[%s377] sm:$0x1]
        %v403 = vld [vmem:[%s382] sm:$0x1]
        %v404 = vld [vmem:[%s395] sm:$0x3]
        %v405 = vld [vmem:[%s389] sm:$0xff]
        %v406 = vld [vmem:[%s389 + $0x8] sm:$0xff]
        %v407 = vld [vmem:[%s389 + $0x10] sm:$0xff]
        %v408 = vld [vmem:[%s389 + $0x18] sm:$0xff]
        %v409 = vld [vmem:[%s389 + $0x20] sm:$0xff]
        %v410 = vld [vmem:[%s389 + $0x28] sm:$0xff]
        %v411 = vld [vmem:[%s389 + $0x30] sm:$0xff]
        %v412 = vld [vmem:[%s389 + $0x38] sm:$0xff]
        %v413 = vld [vmem:[%s389 + $0x40] sm:$0xff]
        %v414 = vld [vmem:[%s389 + $0x48] sm:$0xff]
        %v415 = vld [vmem:[%s389 + $0x50] sm:$0xff]
        %v416 = vld [vmem:[%s389 + $0x58] sm:$0xff]
        %v417 = vld [vmem:[%s389 + $0x60] sm:$0xff]
        %v418 = vld [vmem:[%s389 + $0x68] sm:$0xff]
        %v419 = vld [vmem:[%s389 + $0x70] sm:$0xff]
        %v420 = vld [vmem:[%s389 + $0x78] sm:$0xff]
        %v421 = vrot.slane %v400, 4
        %v422 = vadd.f32 %v400, %v421
        %v423 = vrot.slane %v422, 2
        %v424 = vadd.f32 %v422, %v423
        %v425 = vrot.slane %v424, 1
        %v426 = vadd.f32 %v424, %v425
        %v427 = vrcp.pop 8.0
        %v428 = vmul.f32 %v426, %v427
        %v429 = vsub.f32 %v400, %v428
        %v430 = vmul.f32 %v429, %v429
        %v431 = vrot.slane %v430, 4
        %v432 = vadd.f32 %v430, %v431
        %v433 = vrot.slane %v432, 2
        %v434 = vadd.f32 %v432, %v433
        %v435 = vrot.slane %v434, 1
        %v436 = vadd.f32 %v434, %v435
        %v437 = vmul.f32 %v436, %v427
        %v438 = vadd.f32 %v437, 1e-05
        %v439 = vrsqrt.pop %v438
        %v440 = vmul.f32 %v429, %v439
        %v442 = vlaneseq
        %v443 = vshrl.u32 %v442, 7
        %v444 = vsub.s32 0, %v443
        %v445 = vrot.slane %v402, %v444
        %v447 = vmul.f32 %v440, %v445
        %v449 = vlaneseq
        %v450 = vshrl.u32 %v449, 7
        %v451 = vsub.s32 0, %v450
        %v452 = vrot.slane %v403, %v451
        %v454 = vadd.f32 %v447, %v452
        %v455 = vrot.slane %v401, 4
        %v456 = vadd.f32 %v401, %v455
        %v457 = vrot.slane %v456, 2
        %v458 = vadd.f32 %v456, %v457
        %v459 = vrot.slane %v458, 1
        %v460 = vadd.f32 %v458, %v459
        %v461 = vmul.f32 %v460, %v427
        %v462 = vsub.f32 %v401, %v461
        %v463 = vmul.f32 %v462, %v462
        %v464 = vrot.slane %v463, 4
        %v465 = vadd.f32 %v463, %v464
        %v466 = vrot.slane %v465, 2
        %v467 = vadd.f32 %v465, %v466
        %v468 = vrot.slane %v467, 1
        %v469 = vadd.f32 %v467, %v468
        %v470 = vmul.f32 %v469, %v427
        %v471 = vadd.f32 %v470, 1e-05
        %v472 = vrsqrt.pop %v471
        %v473 = vmul.f32 %v462, %v472
        %v474 = vmul.f32 %v473, %v445
        %v475 = vadd.f32 %v474, %v452
        %v476 = vpack.c.bf16 %v475, %v454
        %v478 = vlaneseq
        %v479 = vshrl.u32 %v478, 7
        %v480 = vsub.s32 0, %v479
        %v481 = vrot.slane %v404, %v480
        %v482 = vlaneseq
        %v483 = vshrl.u32 %v482, 7
        %v484 = vsub.s32 1, %v483
        %v485 = vrot.slane %v404, %v484
        %v504 = vunpack.c.l.b16 %v405
        %v505 = vunpack.c.h.b16 %v405
        %v506 = vunpack.c.l.b16 %v406
        %v507 = vunpack.c.h.b16 %v406
        %v508 = vunpack.c.l.b16 %v407
        %v509 = vunpack.c.h.b16 %v407
        %v510 = vunpack.c.l.b16 %v408
        %v511 = vunpack.c.h.b16 %v408
        %v512 = vunpack.c.l.b16 %v409
        %v513 = vunpack.c.h.b16 %v409
        %v514 = vunpack.c.l.b16 %v410
        %v515 = vunpack.c.h.b16 %v410
        %v516 = vunpack.c.l.b16 %v411
        %v517 = vunpack.c.h.b16 %v411
        %v518 = vunpack.c.l.b16 %v412
        %v519 = vunpack.c.h.b16 %v412
        %v520 = vunpack.c.l.b16 %v413
        %v521 = vunpack.c.h.b16 %v413
        %v522 = vunpack.c.l.b16 %v414
        %v523 = vunpack.c.h.b16 %v414
        %v524 = vunpack.c.l.b16 %v415
        %v525 = vunpack.c.h.b16 %v415
        %v526 = vunpack.c.l.b16 %v416
        %v527 = vunpack.c.h.b16 %v416
        %v528 = vunpack.c.l.b16 %v417
        %v529 = vunpack.c.h.b16 %v417
        %v530 = vunpack.c.l.b16 %v418
        %v531 = vunpack.c.h.b16 %v418
        %v532 = vunpack.c.l.b16 %v419
        %v533 = vunpack.c.h.b16 %v419
        %v534 = vunpack.c.l.b16 %v420
        %v535 = vunpack.c.h.b16 %v420
        %v536 = vpack.c.b16 %v506, %v504
        %v537 = vpack.c.b16 %v507, %v505
        %v538 = vpack.c.b16 %v510, %v508
        %v539 = vpack.c.b16 %v511, %v509
        %v540 = vpack.c.b16 %v514, %v512
        %v541 = vpack.c.b16 %v515, %v513
        %v542 = vpack.c.b16 %v518, %v516
        %v543 = vpack.c.b16 %v519, %v517
        %v544 = vpack.c.b16 %v522, %v520
        %v545 = vpack.c.b16 %v523, %v521
        %v546 = vpack.c.b16 %v526, %v524
        %v547 = vpack.c.b16 %v527, %v525
        %v548 = vpack.c.b16 %v530, %v528
        %v549 = vpack.c.b16 %v531, %v529
        %v550 = vpack.c.b16 %v534, %v532
        %v551 = vpack.c.b16 %v535, %v533
        %568 = vmatprep.subr.bf16.mxu0 %v537
        %569 = vmatpush1.bf16.msra.mxu0 %v536
        %570 = vmatprep.subr.bf16.mxu0 %v539
        %571 = vmatpush1.bf16.msra.mxu0 %v538
        %572 = vmatprep.subr.bf16.mxu0 %v541
        %573 = vmatpush1.bf16.msra.mxu0 %v540
        %574 = vmatprep.subr.bf16.mxu0 %v543
        %575 = vmatpush1.bf16.msra.mxu0 %v542
        %576 = vmatprep.subr.bf16.mxu0 %v545
        %577 = vmatpush1.bf16.msra.mxu0 %v544
        %578 = vmatprep.subr.bf16.mxu0 %v547
        %579 = vmatpush1.bf16.msra.mxu0 %v546
        %580 = vmatprep.subr.bf16.mxu0 %v549
        %581 = vmatpush1.bf16.msra.mxu0 %v548
        %582 = vmatprep.subr.bf16.mxu0 %v551
        %583 = vmatpush1.bf16.msra.mxu0 %v550
        %584 = vmatprep.subr.bf16.mxu0 0
        %585 = vmatpush1.bf16.msra.mxu0 0
        %586 = vmatprep.subr.bf16.mxu0 0
        %587 = vmatpush1.bf16.msra.mxu0 0
        %588 = vmatprep.subr.bf16.mxu0 0
        %589 = vmatpush1.bf16.msra.mxu0 0
        %590 = vmatprep.subr.bf16.mxu0 0
        %591 = vmatpush1.bf16.msra.mxu0 0
        %592 = vmatprep.subr.bf16.mxu0 0
        %593 = vmatpush1.bf16.msra.mxu0 0
        %594 = vmatprep.subr.bf16.mxu0 0
        %595 = vmatpush1.bf16.msra.mxu0 0
        %596 = vmatprep.subr.bf16.mxu0 0
        %597 = vmatpush1.bf16.msra.mxu0 0
        %598 = vmatprep.subr.bf16.mxu0 0
        %599 = vmatpush1.bf16.msra.mxu0 0
        %600 = vmatprep.mubr.bf16.mxu0 0
        %601 = vmatmul.mubr.bf16.gmra.mrb[0].mxu0 %v476
        %v602 = vpop.f32.mrb[0].mxu0
        %v603 = vadd.f32 %v481, %v602
        %v604 = vpop.f32.mrb[0].mxu0
        %v605 = vadd.f32 %v485, %v604
        %v606 = vpop.f32.mrb[0].mxu0
        %v607 = vadd.f32 %v481, %v606
        %v608 = vpop.f32.mrb[0].mxu0
        %v609 = vadd.f32 %v485, %v608
        %610 = vdwg.mxu0
        %611 = vst [vmem:[%s354] sm:$0xff] %v603
        %612 = vst [vmem:[%s354 + $0x8] sm:$0xff] %v605
        %613 = vst [vmem:[%s361] sm:$0xff] %v607
        %614 = vst [vmem:[%s361 + $0x8] sm:$0xff] %v609
        %v615 = vld [vmem:[%s366 + $0x8] sm:$0xff]
        %v616 = vld [vmem:[%s372 + $0x8] sm:$0xff]
        %s617 = scalar_lea.vmem %s377, 1
        %v618 = vld [vmem:[%s617] sm:$0x1]
        %s619 = scalar_lea.vmem %s382, 1
        %v620 = vld [vmem:[%s619] sm:$0x1]
        %s621 = scalar_lea.vmem %s395, 2
        %v622 = vld [vmem:[%s621] sm:$0x3]
        %s623 = scalar_lea.vmem %s389, 128
        %v624 = vld [vmem:[%s623] sm:$0xff]
        %v625 = vld [vmem:[%s623 + $0x8] sm:$0xff]
        %v626 = vld [vmem:[%s623 + $0x10] sm:$0xff]
        %v627 = vld [vmem:[%s623 + $0x18] sm:$0xff]
        %v628 = vld [vmem:[%s623 + $0x20] sm:$0xff]
        %v629 = vld [vmem:[%s623 + $0x28] sm:$0xff]
        %v630 = vld [vmem:[%s623 + $0x30] sm:$0xff]
        %v631 = vld [vmem:[%s623 + $0x38] sm:$0xff]
        %v632 = vld [vmem:[%s623 + $0x40] sm:$0xff]
        %v633 = vld [vmem:[%s623 + $0x48] sm:$0xff]
        %v634 = vld [vmem:[%s623 + $0x50] sm:$0xff]
        %v635 = vld [vmem:[%s623 + $0x58] sm:$0xff]
        %v636 = vld [vmem:[%s623 + $0x60] sm:$0xff]
        %v637 = vld [vmem:[%s623 + $0x68] sm:$0xff]
        %v638 = vld [vmem:[%s623 + $0x70] sm:$0xff]
        %v639 = vld [vmem:[%s623 + $0x78] sm:$0xff]
        %v640 = vrot.slane %v615, 4
        %v641 = vadd.f32 %v615, %v640
        %v642 = vrot.slane %v641, 2
        %v643 = vadd.f32 %v641, %v642
        %v644 = vrot.slane %v643, 1
        %v645 = vadd.f32 %v643, %v644
        %v646 = vmul.f32 %v645, %v427
        %v647 = vsub.f32 %v615, %v646
        %v648 = vmul.f32 %v647, %v647
        %v649 = vrot.slane %v648, 4
        %v650 = vadd.f32 %v648, %v649
        %v651 = vrot.slane %v650, 2
        %v652 = vadd.f32 %v650, %v651
        %v653 = vrot.slane %v652, 1
        %v654 = vadd.f32 %v652, %v653
        %v655 = vmul.f32 %v654, %v427
        %v656 = vadd.f32 %v655, 1e-05
        %v657 = vrsqrt.pop %v656
        %v658 = vmul.f32 %v647, %v657
        %v660 = vlaneseq
        %v661 = vshrl.u32 %v660, 7
        %v662 = vsub.s32 0, %v661
        %v663 = vrot.slane %v618, %v662
        %v665 = vmul.f32 %v658, %v663
        %v667 = vlaneseq
        %v668 = vshrl.u32 %v667, 7
        %v669 = vsub.s32 0, %v668
        %v670 = vrot.slane %v620, %v669
        %v672 = vadd.f32 %v665, %v670
        %v673 = vrot.slane %v616, 4
        %v674 = vadd.f32 %v616, %v673
        %v675 = vrot.slane %v674, 2
        %v676 = vadd.f32 %v674, %v675
        %v677 = vrot.slane %v676, 1
        %v678 = vadd.f32 %v676, %v677
        %v679 = vmul.f32 %v678, %v427
        %v680 = vsub.f32 %v616, %v679
        %v681 = vmul.f32 %v680, %v680
        %v682 = vrot.slane %v681, 4
        %v683 = vadd.f32 %v681, %v682
        %v684 = vrot.slane %v683, 2
        %v685 = vadd.f32 %v683, %v684
        %v686 = vrot.slane %v685, 1
        %v687 = vadd.f32 %v685, %v686
        %v688 = vmul.f32 %v687, %v427
        %v689 = vadd.f32 %v688, 1e-05
        %v690 = vrsqrt.pop %v689
        %v691 = vmul.f32 %v680, %v690
        %v692 = vmul.f32 %v691, %v663
        %v693 = vadd.f32 %v692, %v670
        %v694 = vpack.c.bf16 %v693, %v672
        %v696 = vlaneseq
        %v697 = vshrl.u32 %v696, 7
        %v698 = vsub.s32 0, %v697
        %v699 = vrot.slane %v622, %v698
        %v700 = vlaneseq
        %v701 = vshrl.u32 %v700, 7
        %v702 = vsub.s32 1, %v701
        %v703 = vrot.slane %v622, %v702
        %v722 = vunpack.c.l.b16 %v624
        %v723 = vunpack.c.h.b16 %v624
        %v724 = vunpack.c.l.b16 %v625
        %v725 = vunpack.c.h.b16 %v625
        %v726 = vunpack.c.l.b16 %v626
        %v727 = vunpack.c.h.b16 %v626
        %v728 = vunpack.c.l.b16 %v627
        %v729 = vunpack.c.h.b16 %v627
        %v730 = vunpack.c.l.b16 %v628
        %v731 = vunpack.c.h.b16 %v628
        %v732 = vunpack.c.l.b16 %v629
        %v733 = vunpack.c.h.b16 %v629
        %v734 = vunpack.c.l.b16 %v630
        %v735 = vunpack.c.h.b16 %v630
        %v736 = vunpack.c.l.b16 %v631
        %v737 = vunpack.c.h.b16 %v631
        %v738 = vunpack.c.l.b16 %v632
        %v739 = vunpack.c.h.b16 %v632
        %v740 = vunpack.c.l.b16 %v633
        %v741 = vunpack.c.h.b16 %v633
        %v742 = vunpack.c.l.b16 %v634
        %v743 = vunpack.c.h.b16 %v634
        %v744 = vunpack.c.l.b16 %v635
        %v745 = vunpack.c.h.b16 %v635
        %v746 = vunpack.c.l.b16 %v636
        %v747 = vunpack.c.h.b16 %v636
        %v748 = vunpack.c.l.b16 %v637
        %v749 = vunpack.c.h.b16 %v637
        %v750 = vunpack.c.l.b16 %v638
        %v751 = vunpack.c.h.b16 %v638
        %v752 = vunpack.c.l.b16 %v639
        %v753 = vunpack.c.h.b16 %v639
        %v754 = vpack.c.b16 %v724, %v722
        %v755 = vpack.c.b16 %v725, %v723
        %v756 = vpack.c.b16 %v728, %v726
        %v757 = vpack.c.b16 %v729, %v727
        %v758 = vpack.c.b16 %v732, %v730
        %v759 = vpack.c.b16 %v733, %v731
        %v760 = vpack.c.b16 %v736, %v734
        %v761 = vpack.c.b16 %v737, %v735
        %v762 = vpack.c.b16 %v740, %v738
        %v763 = vpack.c.b16 %v741, %v739
        %v764 = vpack.c.b16 %v744, %v742
        %v765 = vpack.c.b16 %v745, %v743
        %v766 = vpack.c.b16 %v748, %v746
        %v767 = vpack.c.b16 %v749, %v747
        %v768 = vpack.c.b16 %v752, %v750
        %v769 = vpack.c.b16 %v753, %v751
        %786 = vmatprep.subr.bf16.mxu0 %v755
        %787 = vmatpush1.bf16.msra.mxu0 %v754
        %788 = vmatprep.subr.bf16.mxu0 %v757
        %789 = vmatpush1.bf16.msra.mxu0 %v756
        %790 = vmatprep.subr.bf16.mxu0 %v759
        %791 = vmatpush1.bf16.msra.mxu0 %v758
        %792 = vmatprep.subr.bf16.mxu0 %v761
        %793 = vmatpush1.bf16.msra.mxu0 %v760
        %794 = vmatprep.subr.bf16.mxu0 %v763
        %795 = vmatpush1.bf16.msra.mxu0 %v762
        %796 = vmatprep.subr.bf16.mxu0 %v765
        %797 = vmatpush1.bf16.msra.mxu0 %v764
        %798 = vmatprep.subr.bf16.mxu0 %v767
        %799 = vmatpush1.bf16.msra.mxu0 %v766
        %800 = vmatprep.subr.bf16.mxu0 %v769
        %801 = vmatpush1.bf16.msra.mxu0 %v768
        %802 = vmatprep.subr.bf16.mxu0 0
        %803 = vmatpush1.bf16.msra.mxu0 0
        %804 = vmatprep.subr.bf16.mxu0 0
        %805 = vmatpush1.bf16.msra.mxu0 0
        %806 = vmatprep.subr.bf16.mxu0 0
        %807 = vmatpush1.bf16.msra.mxu0 0
        %808 = vmatprep.subr.bf16.mxu0 0
        %809 = vmatpush1.bf16.msra.mxu0 0
        %810 = vmatprep.subr.bf16.mxu0 0
        %811 = vmatpush1.bf16.msra.mxu0 0
        %812 = vmatprep.subr.bf16.mxu0 0
        %813 = vmatpush1.bf16.msra.mxu0 0
        %814 = vmatprep.subr.bf16.mxu0 0
        %815 = vmatpush1.bf16.msra.mxu0 0
        %816 = vmatprep.subr.bf16.mxu0 0
        %817 = vmatpush1.bf16.msra.mxu0 0
        %818 = vmatprep.mubr.bf16.mxu0 0
        %819 = vmatmul.mubr.bf16.gmra.mrb[0].mxu0 %v694
        %v820 = vpop.f32.mrb[0].mxu0
        %v821 = vadd.f32 %v699, %v820
        %v822 = vpop.f32.mrb[0].mxu0
        %v823 = vadd.f32 %v703, %v822
        %v824 = vpop.f32.mrb[0].mxu0
        %v825 = vadd.f32 %v699, %v824
        %v826 = vpop.f32.mrb[0].mxu0
        %v827 = vadd.f32 %v703, %v826
        %828 = vdwg.mxu0
        %s829 = scalar_lea.vmem %s354, 16 [#allocation2]
        %830 = vst [vmem:[%s829] sm:$0xff] %v821
        %831 = vst [vmem:[%s829 + $0x8] sm:$0xff] %v823
        %s832 = scalar_lea.vmem %s361, 16 [#allocation4]
        %833 = vst [vmem:[%s832] sm:$0xff] %v825
        %834 = vst [vmem:[%s832 + $0x8] sm:$0xff] %v827
        %s835 = sand.u32 %s189, 1
        %s836 = scalar_lea.sflag [#allocation3], %s835
        %s837 = sand.u32 %s189, 1
        %s838 = smul.addr %s837, 32
        %s839 = scalar_lea.vmem [#allocation2], %s838
        %s840 = sand.u32 %s215, 1
        %s841 = scalar_lea.sflag [#allocation5], %s840
        %s842 = sand.u32 %s215, 1
        %s843 = smul.addr %s842, 32
        %s844 = scalar_lea.vmem [#allocation4], %s843
        // Predicated region
        $region45: #{part_classifier_forward.1} parent=43 // pred_check
          %p845 = pneg %p199
        $region46: #{part_classifier_forward.1} parent=43 // pred_check_branch
          %847 = sbr.rel (%p845) target = $region48
        $region47: #{part_classifier_forward.1} parent=43 // pred_region
          %s848 = smul.u32 2, %s25
          %s850 = ssub.s32 512, 512
          %851 = vsyncadd %s836, %s850
          %s852 = smul.addr %s848, 2
          %s853 = smul.addr %s852, 128
          %s854 = scalar_lea.hbm %s6, %s853
          %s855 = sshll.u32 %s839, 4
          %s856 = int_to_ptr.vmem [resolvable:$true] %s855
          %861 = dma.vmem_to_hbm [thread:$0]  %s856, 512, %s854, %s836, 256, 256, 16
        $region48: #{part_classifier_forward.1} parent=43 // pred_fallthru
          _
        // Predicated region
        $region49: #{part_classifier_forward.1} parent=43 // pred_check
          %p862 = pneg %p225
        $region50: #{part_classifier_forward.1} parent=43 // pred_check_branch
          %864 = sbr.rel (%p862) target = $region52
        $region51: #{part_classifier_forward.1} parent=43 // pred_region
          %s865 = smul.u32 2, %s25
          %s867 = ssub.s32 512, 512
          %868 = vsyncadd %s841, %s867
          %s869 = smul.addr %s865, 2
          %s870 = smul.addr %s869, 128
          %s871 = scalar_lea.hbm %s7, %s870
          %s872 = sshll.u32 %s844, 4
          %s873 = int_to_ptr.vmem [resolvable:$true] %s872
          %878 = dma.vmem_to_hbm [thread:$0]  %s873, 512, %s871, %s841, 256, 256, 16
        $region52: #{part_classifier_forward.1} parent=43 // pred_fallthru
          _
      $region44: #{part_classifier_forward.1} parent=5 // pred_fallthru
        _
      %p879 = scmp.le.s32.totalorder 2, %s20
      // Predicated region
      $region53: #{part_classifier_forward.1} parent=5 // pred_check
        %p880 = pneg %p879
      $region54: #{part_classifier_forward.1} parent=5 // pred_check_branch
        %882 = sbr.rel (%p880) target = $region56
      $region55: #{part_classifier_forward.1} parent=5 // pred_region
        %s883 = ssub.s32 %s20, 2
        // Predicated region
        $region57: #{part_classifier_forward.1} parent=55 // pred_check
          %p884 = pneg %p205
        $region58: #{part_classifier_forward.1} parent=55 // pred_check_branch
          %886 = sbr.rel (%p884) target = $region60
        $region59: #{part_classifier_forward.1} parent=55 // pred_region
          %s887 = sand.u32 %s190, 1
          %s888 = scalar_lea.sflag [#allocation3], %s887
          %s889 = sand.u32 %s190, 1
          %s890 = smul.addr %s889, 32
          %s891 = scalar_lea.vmem [#allocation2], %s890
          %892 = dma.done %s888, 512
        $region60: #{part_classifier_forward.1} parent=55 // pred_fallthru
          _
        // Predicated region
        $region61: #{part_classifier_forward.1} parent=55 // pred_check
          %p893 = pneg %p231
        $region62: #{part_classifier_forward.1} parent=55 // pred_check_branch
          %895 = sbr.rel (%p893) target = $region64
        $region63: #{part_classifier_forward.1} parent=55 // pred_region
          %s896 = sand.u32 %s216, 1
          %s897 = scalar_lea.sflag [#allocation5], %s896
          %s898 = sand.u32 %s216, 1
          %s899 = smul.addr %s898, 32
          %s900 = scalar_lea.vmem [#allocation4], %s899
          %901 = dma.done %s897, 512
        $region64: #{part_classifier_forward.1} parent=55 // pred_fallthru
          _
      $region56: #{part_classifier_forward.1} parent=5 // pred_fallthru
        _
    $region6: #{part_classifier_forward.1} parent=1 // loop_footer
      %s24 = sadd.s32 1, %s20
    $region7: #{part_classifier_forward.1} parent=1 // loop_footer_branch
      %19 = sbr.rel target = $region3
    $region8: #{part_classifier_forward.1} parent=1 // loop_exit
      _
    %902 = vsyncpa [#allocation3], 1
    %s903 = scalar_lea.sflag [#allocation3], 1
    %904 = vsyncpa %s903, 1
    %905 = vsyncpa [#allocation5], 1
    %s906 = scalar_lea.sflag [#allocation5], 1
    %907 = vsyncpa %s906, 1

</llo_original>
